<compile_context>
chip_gen: v6e
topology: v6e:2x2x1
jax: 0.10.0
libtpu: 0.0.40
codegen_flags: <defaults>
</compile_context>

<pallas_src>
import jax
import jax.numpy as jnp
from jax.experimental import pallas as pl
from jax.experimental.pallas import tpu as pltpu

LN_EPS = 1e-5          # PyTorch nn.LayerNorm default
LRELU_SLOPE = 0.2      # nn.LeakyReLU(0.2)


def _round_up(n, m):
    return ((n + m - 1) // m) * m


def _pick_lane_multiple(d):
    """256 for 256-wide MXUs (v6e/v7x) when D spans >1 MXU tile; 128 otherwise."""
    if d <= 128:
        return 128
    try:
        kind = jax.devices()[0].device_kind.lower()
    except Exception:
        return 128
    for old in ("v2", "v3", "v4", "v5"):
        if old in kind:
            return 128
    return 256


def _vmem_capacity_bytes():
    try:
        return int(pltpu.get_tpu_info().vmem_capacity_bytes)
    except Exception:
        return 64 << 20  # conservative fallback (v7x per-TC)


def _make_kernel(d_true, d_pad, matmul_dtype):
    """Kernel with the true feature dim and padded-lane correction baked in."""
    inv_d = 1.0 / float(d_true)
    n_pad = d_pad - d_true

    def _leaky_relu(h):
        # single VPU max instead of compare + select
        return jnp.maximum(h, LRELU_SLOPE * h)

    def _layernorm(h, gamma, beta):
        # Two-pass (h - mean) form: numerically stable when |mean| >> std.
        # Padded lanes of h are exactly 0, so their centered value is -mean;
        # subtract n_pad * mean^2 to recover the exact true-D sum of squares.
        mean = jnp.sum(h, axis=-1, keepdims=True) * inv_d
        c = h - mean
        s2 = jnp.sum(c * c, axis=-1, keepdims=True)
        if n_pad:
            s2 = s2 - float(n_pad) * (mean * mean)
        var = jnp.maximum(s2 * inv_d, 0.0)
        # gamma/beta are zero in padded lanes -> output padded lanes stay exactly 0.
        return c * jax.lax.rsqrt(var + LN_EPS) * gamma + beta

    def kernel(x_ref, w1t_ref, w2t_ref, vec_ref, o_ref):
        x = x_ref[...].astype(jnp.float32)

        # Packed resident slab: rows 0..5 = b1, g1, be1, b2, g2, be2 (f32).
        b1, g1, be1 = vec_ref[0:1, :], vec_ref[1:2, :], vec_ref[2:3, :]
        b2, g2, be2 = vec_ref[3:4, :], vec_ref[4:5, :], vec_ref[5:6, :]

        # Block 1: Linear -> LeakyReLU -> LayerNorm (bf16 MXU inputs, f32 accumulate)
        h = jnp.dot(x.astype(matmul_dtype), w1t_ref[...],
                    preferred_element_type=jnp.float32) + b1
        h = _layernorm(_leaky_relu(h), g1, be1)

        # Block 2: Linear -> LeakyReLU -> LayerNorm
        h = jnp.dot(h.astype(matmul_dtype), w2t_ref[...],
                    preferred_element_type=jnp.float32) + b2
        h = _layernorm(_leaky_relu(h), g2, be2)

        # Residual skip (f32)
        o_ref[...] = (x + h).astype(o_ref.dtype)

    return kernel


def prepare_params(params, matmul_dtype=jnp.bfloat16):
    """One-time: transpose Linear weights, pad feature dim (lane-dense, MXU-width
    aware), cast weights for the MXU, pack the six small vectors into one slab.
    Do NOT call this inside the per-step forward."""
    D = params["w1"].shape[0]
    Dp = _round_up(D, _pick_lane_multiple(D))
    pad = Dp - D

    def pad_mat(w):  # PyTorch (out,in) -> transposed, zero-padded (Dp, Dp)
        wt = jnp.asarray(w, jnp.float32).T
        return jnp.pad(wt, ((0, pad), (0, pad))).astype(matmul_dtype)

    def pad_vec(v):  # (D,) -> (Dp,), zero-padded (padded lanes stay exactly 0)
        return jnp.pad(jnp.asarray(v, jnp.float32), (0, pad))

    vecs = jnp.stack([pad_vec(params["b1"]), pad_vec(params["g1"]), pad_vec(params["be1"]),
                      pad_vec(params["b2"]), pad_vec(params["g2"]), pad_vec(params["be2"]),
                      jnp.zeros((Dp,), jnp.float32), jnp.zeros((Dp,), jnp.float32)], axis=0)

    return {
        "w1t": pad_mat(params["w1"]), "w2t": pad_mat(params["w2"]),
        "vecs": vecs,                                  # (8, Dp) f32, one resident DMA
        "d_true": D, "d_pad": Dp, "matmul_dtype": matmul_dtype,
    }


def residual_forward(x, kparams, max_batch_tile=1024):
    """x: (B, D) float32.  kparams: output of prepare_params()."""
    B, D = x.shape
    assert D == kparams["d_true"], "feature dim mismatch with prepared params"
    Dp = kparams["d_pad"]
    matmul_dtype = kparams["matmul_dtype"]
    itemsize = jnp.dtype(matmul_dtype).itemsize

    # ---- batch tile sizing -------------------------------------------------
    Bp_min = _round_up(max(B, 8), 8)
    TB = min(_round_up(int(max_batch_tile), 8), Bp_min)
    # Guarantee >= 2 grid steps when the batch allows it, so the 'parallel'
    # batch axis can shard across v7x's two TensorCores.
    if Bp_min // TB < 2 and Bp_min >= 16:
        TB = _round_up((Bp_min + 1) // 2, 8)

    # ---- generation-aware VMEM plan ----------------------------------------
    vmem_cap = _vmem_capacity_bytes()
    budget = int(vmem_cap * 0.85)

    def vmem_est(tb):
        weights = 2 * Dp * Dp * itemsize        # two matrices, single-buffered
        vecs = 8 * Dp * 4                       # packed slab, single-buffered
        tiles = 2 * 2 * tb * Dp * 4             # x + out tiles, double-buffered
        temps = 4 * tb * Dp * 4                 # h / centered / cast headroom
        return weights + vecs + tiles + temps

    while vmem_est(TB) > budget and TB > 8:
        TB = _round_up(max(TB // 2, 8), 8)
    if vmem_est(TB) > budget:
        # TODO(synk): stream K-slabs of w1t/w2t (pl.ANY + pltpu.emit_pipeline)
        # when the weights alone exceed the VMEM budget.
        raise ValueError("Residual weights do not fit the VMEM budget; "
                         "D too large for the fully-resident plan on this chip.")

    Bp = _round_up(B, TB)
    grid = (Bp // TB,)

    # ---- host-side padding only when actually needed ------------------------
    if Bp == B and Dp == D:
        x_in = x.astype(jnp.float32)
    else:
        x_in = jnp.pad(x.astype(jnp.float32), ((0, Bp - B), (0, Dp - D)))

    # ---- specs ---------------------------------------------------------------
    x_spec = pl.BlockSpec((TB, Dp), lambda i: (i, 0))            # streamed, 2-buffered
    mat_spec = pl.BlockSpec((Dp, Dp), lambda i: (0, 0),
                            pipeline_mode=pl.Buffered(1))        # resident, 1 buffer
    vec_spec = pl.BlockSpec((8, Dp), lambda i: (0, 0),
                            pipeline_mode=pl.Buffered(1))        # resident, 1 buffer

    vmem_limit = min(max(vmem_est(TB) + (8 << 20), 32 << 20), budget)

    cost = pl.CostEstimate(
        flops=4 * Bp * Dp * Dp,                                  # two DxD matmuls
        transcendentals=2 * Bp,                                  # one rsqrt per row per LN
        bytes_accessed=2 * Bp * Dp * 4 + 2 * Dp * Dp * itemsize + 8 * Dp * 4)

    kernel = _make_kernel(kparams["d_true"], Dp, matmul_dtype)

    out_pad = pl.pallas_call(
        kernel,
        out_shape=jax.ShapeDtypeStruct((Bp, Dp), x.dtype),
        grid=grid,
        in_specs=[x_spec, mat_spec, mat_spec, vec_spec],
        out_specs=x_spec,
        compiler_params=pltpu.CompilerParams(
            dimension_semantics=("parallel",),
            vmem_limit_bytes=int(vmem_limit)),
        cost_estimate=cost,
    )(x_in, kparams["w1t"], kparams["w2t"], kparams["vecs"])

    if Bp == B and Dp == D:
        return out_pad
    return out_pad[:B, :D]


def init_params(key, dim):
    """Deterministic parameter init mirroring nn.Linear / nn.LayerNorm shapes."""
    k1, k2, k3, k4 = jax.random.split(key, 4)
    bound = 1.0 / jnp.sqrt(dim)
    return {
        "w1": jax.random.uniform(k1, (dim, dim), jnp.float32, -bound, bound),
        "b1": jax.random.uniform(k2, (dim,), jnp.float32, -bound, bound),
        "g1": jnp.ones((dim,), jnp.float32),
        "be1": jnp.zeros((dim,), jnp.float32),
        "w2": jax.random.uniform(k3, (dim, dim), jnp.float32, -bound, bound),
        "b2": jax.random.uniform(k4, (dim,), jnp.float32, -bound, bound),
        "g2": jnp.ones((dim,), jnp.float32),
        "be2": jnp.zeros((dim,), jnp.float32),
    }


def residual_reference(x, p):
    """Pure-JAX f32 reference of the PyTorch forward, for validation."""
    h = x @ p["w1"].T + p["b1"]
    h = jnp.where(h > 0, h, LRELU_SLOPE * h)
    m = h.mean(-1, keepdims=True)
    v = ((h - m) ** 2).mean(-1, keepdims=True)
    h = (h - m) * jax.lax.rsqrt(v + LN_EPS) * p["g1"] + p["be1"]
    h = h @ p["w2"].T + p["b2"]
    h = jnp.where(h > 0, h, LRELU_SLOPE * h)
    m = h.mean(-1, keepdims=True)
    v = ((h - m) ** 2).mean(-1, keepdims=True)
    h = (h - m) * jax.lax.rsqrt(v + LN_EPS) * p["g2"] + p["be2"]
    return x + h


if __name__ == "__main__":
    # Small demo shape; D=32 exercises the feature-dim padding path (32 -> 128
    # lanes + padded-lane LN correction), B=8 exercises a single 8-row tile.
    B, D = 8, 32
    key = jax.random.PRNGKey(0)
    kx, kp = jax.random.split(key)
    x = jax.random.normal(kx, (B, D), jnp.float32)
    params = init_params(kp, D)

    # One-time weight prep (transpose + pad + bf16 cast + vec packing).
    kparams = prepare_params(params, matmul_dtype=jnp.bfloat16)

    out = residual_forward(x, kparams)
    out = jax.block_until_ready(out)

    ref = residual_reference(x, params)
    assert out.shape == (B, D)
    # Tolerance accounts for bf16 MXU inputs (accumulation / LN / residual are f32).
    assert jnp.allclose(out, ref, atol=5e-2, rtol=5e-2), "mismatch vs reference"

    print("KERNEL_OK")
</pallas_src>

<mosaic_0001>
module attributes {stable_mosaic.version = 11 : i64} {
  func.func @kernel(%arg0: i32, %arg1: memref<8x128xf32, #tpu.memory_space<vmem>>, %arg2: memref<128x128xbf16, #tpu.memory_space<vmem>>, %arg3: memref<128x128xbf16, #tpu.memory_space<vmem>>, %arg4: memref<8x128xf32, #tpu.memory_space<vmem>>, %arg5: memref<8x128xf32, #tpu.memory_space<vmem>>) attributes {dimension_semantics = [#tpu.dimension_semantics<parallel>], iteration_bounds = array<i64: 1>, scalar_prefetch = 0 : i64, scratch_operands = 0 : i64, tpu.core_type = #tpu.core_type<tc>, window_params = [{transform_indices = @transform_0, window_bounds = array<i64: 8, 128>}, {pipeline_mode = #tpu.pipeline_mode<synchronous>, transform_indices = @transform_1, window_bounds = array<i64: 128, 128>}, {pipeline_mode = #tpu.pipeline_mode<synchronous>, transform_indices = @transform_2, window_bounds = array<i64: 128, 128>}, {pipeline_mode = #tpu.pipeline_mode<synchronous>, transform_indices = @transform_3, window_bounds = array<i64: 8, 128>}, {transform_indices = @transform_4, window_bounds = array<i64: 8, 128>}]} {
    %c0 = arith.constant 0 : index
    %c0_0 = arith.constant 0 : index
    %0 = vector.load %arg1[%c0, %c0_0] : memref<8x128xf32, #tpu.memory_space<vmem>>, vector<8x128xf32>
    %c0_1 = arith.constant 0 : index
    %c0_2 = arith.constant 0 : index
    %1 = vector.load %arg4[%c0_1, %c0_2] : memref<8x128xf32, #tpu.memory_space<vmem>>, vector<1x128xf32>
    %c1 = arith.constant 1 : index
    %c0_3 = arith.constant 0 : index
    %2 = vector.load %arg4[%c1, %c0_3] : memref<8x128xf32, #tpu.memory_space<vmem>>, vector<1x128xf32>
    %c2 = arith.constant 2 : index
    %c0_4 = arith.constant 0 : index
    %3 = vector.load %arg4[%c2, %c0_4] : memref<8x128xf32, #tpu.memory_space<vmem>>, vector<1x128xf32>
    %c3 = arith.constant 3 : index
    %c0_5 = arith.constant 0 : index
    %4 = vector.load %arg4[%c3, %c0_5] : memref<8x128xf32, #tpu.memory_space<vmem>>, vector<1x128xf32>
    %c4 = arith.constant 4 : index
    %c0_6 = arith.constant 0 : index
    %5 = vector.load %arg4[%c4, %c0_6] : memref<8x128xf32, #tpu.memory_space<vmem>>, vector<1x128xf32>
    %c5 = arith.constant 5 : index
    %c0_7 = arith.constant 0 : index
    %6 = vector.load %arg4[%c5, %c0_7] : memref<8x128xf32, #tpu.memory_space<vmem>>, vector<1x128xf32>
    %7 = arith.truncf %0 : vector<8x128xf32> to vector<8x128xbf16>
    %c0_8 = arith.constant 0 : index
    %c0_9 = arith.constant 0 : index
    %8 = vector.load %arg2[%c0_8, %c0_9] : memref<128x128xbf16, #tpu.memory_space<vmem>>, vector<128x128xbf16>
    %cst = arith.constant dense<0.000000e+00> : vector<8x128xf32>
    %9 = tpu.matmul %7, %8, %cst {dimension_numbers = #tpu.dot_dimension_numbers<[1], [0], [0], [1], [0, 0, 1, 1], [], []>} : vector<8x128xbf16>, vector<128x128xbf16>, vector<8x128xf32> -> vector<8x128xf32>
    %10 = vector.broadcast %1 : vector<1x128xf32> to vector<8x128xf32>
    %11 = arith.addf %9, %10 : vector<8x128xf32>
    %cst_10 = arith.constant 2.000000e-01 : f32
    %12 = vector.broadcast %cst_10 : f32 to vector<8x128xf32>
    %13 = arith.mulf %12, %11 : vector<8x128xf32>
    %14 = arith.maximumf %11, %13 : vector<8x128xf32>
    %cst_11 = arith.constant dense<0.000000e+00> : vector<8xf32>
    %15 = vector.multi_reduction <add>, %14, %cst_11 [1] : vector<8x128xf32> to vector<8xf32>
    %16 = vector.shape_cast %15 : vector<8xf32> to vector<8x1xf32>
    %cst_12 = arith.constant 3.125000e-02 : f32
    %17 = vector.broadcast %cst_12 : f32 to vector<8x1xf32>
    %18 = arith.mulf %16, %17 : vector<8x1xf32>
    %19 = vector.broadcast %18 : vector<8x1xf32> to vector<8x128xf32>
    %20 = arith.subf %14, %19 : vector<8x128xf32>
    %21 = arith.mulf %20, %20 : vector<8x128xf32>
    %cst_13 = arith.constant dense<0.000000e+00> : vector<8xf32>
    %22 = vector.multi_reduction <add>, %21, %cst_13 [1] : vector<8x128xf32> to vector<8xf32>
    %23 = vector.shape_cast %22 : vector<8xf32> to vector<8x1xf32>
    %24 = arith.mulf %18, %18 : vector<8x1xf32>
    %cst_14 = arith.constant 9.600000e+01 : f32
    %25 = vector.broadcast %cst_14 : f32 to vector<8x1xf32>
    %26 = arith.mulf %25, %24 : vector<8x1xf32>
    %27 = arith.subf %23, %26 : vector<8x1xf32>
    %cst_15 = arith.constant 3.125000e-02 : f32
    %28 = vector.broadcast %cst_15 : f32 to vector<8x1xf32>
    %29 = arith.mulf %27, %28 : vector<8x1xf32>
    %cst_16 = arith.constant 0.000000e+00 : f32
    %30 = vector.broadcast %cst_16 : f32 to vector<8x1xf32>
    %31 = arith.maximumf %29, %30 : vector<8x1xf32>
    %cst_17 = arith.constant 9.99999974E-6 : f32
    %32 = vector.broadcast %cst_17 : f32 to vector<8x1xf32>
    %33 = arith.addf %31, %32 : vector<8x1xf32>
    %34 = math.rsqrt %33 : vector<8x1xf32>
    %35 = vector.broadcast %34 : vector<8x1xf32> to vector<8x128xf32>
    %36 = arith.mulf %20, %35 : vector<8x128xf32>
    %37 = vector.broadcast %2 : vector<1x128xf32> to vector<8x128xf32>
    %38 = arith.mulf %36, %37 : vector<8x128xf32>
    %39 = vector.broadcast %3 : vector<1x128xf32> to vector<8x128xf32>
    %40 = arith.addf %38, %39 : vector<8x128xf32>
    %41 = arith.truncf %40 : vector<8x128xf32> to vector<8x128xbf16>
    %c0_18 = arith.constant 0 : index
    %c0_19 = arith.constant 0 : index
    %42 = vector.load %arg3[%c0_18, %c0_19] : memref<128x128xbf16, #tpu.memory_space<vmem>>, vector<128x128xbf16>
    %cst_20 = arith.constant dense<0.000000e+00> : vector<8x128xf32>
    %43 = tpu.matmul %41, %42, %cst_20 {dimension_numbers = #tpu.dot_dimension_numbers<[1], [0], [0], [1], [0, 0, 1, 1], [], []>} : vector<8x128xbf16>, vector<128x128xbf16>, vector<8x128xf32> -> vector<8x128xf32>
    %44 = vector.broadcast %4 : vector<1x128xf32> to vector<8x128xf32>
    %45 = arith.addf %43, %44 : vector<8x128xf32>
    %cst_21 = arith.constant 2.000000e-01 : f32
    %46 = vector.broadcast %cst_21 : f32 to vector<8x128xf32>
    %47 = arith.mulf %46, %45 : vector<8x128xf32>
    %48 = arith.maximumf %45, %47 : vector<8x128xf32>
    %cst_22 = arith.constant dense<0.000000e+00> : vector<8xf32>
    %49 = vector.multi_reduction <add>, %48, %cst_22 [1] : vector<8x128xf32> to vector<8xf32>
    %50 = vector.shape_cast %49 : vector<8xf32> to vector<8x1xf32>
    %cst_23 = arith.constant 3.125000e-02 : f32
    %51 = vector.broadcast %cst_23 : f32 to vector<8x1xf32>
    %52 = arith.mulf %50, %51 : vector<8x1xf32>
    %53 = vector.broadcast %52 : vector<8x1xf32> to vector<8x128xf32>
    %54 = arith.subf %48, %53 : vector<8x128xf32>
    %55 = arith.mulf %54, %54 : vector<8x128xf32>
    %cst_24 = arith.constant dense<0.000000e+00> : vector<8xf32>
    %56 = vector.multi_reduction <add>, %55, %cst_24 [1] : vector<8x128xf32> to vector<8xf32>
    %57 = vector.shape_cast %56 : vector<8xf32> to vector<8x1xf32>
    %58 = arith.mulf %52, %52 : vector<8x1xf32>
    %cst_25 = arith.constant 9.600000e+01 : f32
    %59 = vector.broadcast %cst_25 : f32 to vector<8x1xf32>
    %60 = arith.mulf %59, %58 : vector<8x1xf32>
    %61 = arith.subf %57, %60 : vector<8x1xf32>
    %cst_26 = arith.constant 3.125000e-02 : f32
    %62 = vector.broadcast %cst_26 : f32 to vector<8x1xf32>
    %63 = arith.mulf %61, %62 : vector<8x1xf32>
    %cst_27 = arith.constant 0.000000e+00 : f32
    %64 = vector.broadcast %cst_27 : f32 to vector<8x1xf32>
    %65 = arith.maximumf %63, %64 : vector<8x1xf32>
    %cst_28 = arith.constant 9.99999974E-6 : f32
    %66 = vector.broadcast %cst_28 : f32 to vector<8x1xf32>
    %67 = arith.addf %65, %66 : vector<8x1xf32>
    %68 = math.rsqrt %67 : vector<8x1xf32>
    %69 = vector.broadcast %68 : vector<8x1xf32> to vector<8x128xf32>
    %70 = arith.mulf %54, %69 : vector<8x128xf32>
    %71 = vector.broadcast %5 : vector<1x128xf32> to vector<8x128xf32>
    %72 = arith.mulf %70, %71 : vector<8x128xf32>
    %73 = vector.broadcast %6 : vector<1x128xf32> to vector<8x128xf32>
    %74 = arith.addf %72, %73 : vector<8x128xf32>
    %75 = arith.addf %0, %74 : vector<8x128xf32>
    %c0_29 = arith.constant 0 : index
    %c0_30 = arith.constant 0 : index
    %76 = vector.load %arg5[%c0_29, %c0_30] : memref<8x128xf32, #tpu.memory_space<vmem>>, vector<8x128xf32>
    tpu.vector_store %arg5[%c0_29, %c0_30], %75 {strides = array<i32>} : memref<8x128xf32, #tpu.memory_space<vmem>>, vector<8x128xf32>,
    return
  }
  func.func @transform_0(%arg0: i32) -> (i32, i32) {
    %c0_i32 = arith.constant 0 : i32
    %c0_i32_0 = arith.constant 0 : i32
    return %arg0, %c0_i32 : i32, i32
  }
  func.func @transform_1(%arg0: i32) -> (i32, i32) {
    %c0_i32 = arith.constant 0 : i32
    %c0_i32_0 = arith.constant 0 : i32
    %c0_i32_1 = arith.constant 0 : i32
    return %c0_i32, %c0_i32_0 : i32, i32
  }
  func.func @transform_2(%arg0: i32) -> (i32, i32) {
    %c0_i32 = arith.constant 0 : i32
    %c0_i32_0 = arith.constant 0 : i32
    %c0_i32_1 = arith.constant 0 : i32
    return %c0_i32, %c0_i32_0 : i32, i32
  }
  func.func @transform_3(%arg0: i32) -> (i32, i32) {
    %c0_i32 = arith.constant 0 : i32
    %c0_i32_0 = arith.constant 0 : i32
    %c0_i32_1 = arith.constant 0 : i32
    return %c0_i32, %c0_i32_0 : i32, i32
  }
  func.func @transform_4(%arg0: i32) -> (i32, i32) {
    %c0_i32 = arith.constant 0 : i32
    %c0_i32_0 = arith.constant 0 : i32
    return %arg0, %c0_i32 : i32, i32
  }
}

</mosaic_0001>

<llo_original>
// kernel: tpu_custom_call.1
$region0: #{tpu_custom_call.1}
  #allocation0 [shape = 'u32[]', space=smem, size = 0x4, offset = 0x4, fixed_abs, tag = 'smem constant byte address 0x4 - core index']
  #allocation1 [shape = 'u32[144,128]{1,0:T(1,128)}', space=vmem, size = 0x12000, scoped, tag = 'internal scratch']
  %s0 = inlined_call_operand.hbm [shape: f32[8,128], index: 0, kind: input, shape index: {}]
  %s1 = inlined_call_operand.hbm [shape: bf16[128,128], index: 1, kind: input, shape index: {}]
  %s2 = inlined_call_operand.hbm [shape: bf16[128,128], index: 2, kind: input, shape index: {}]
  %s3 = inlined_call_operand.hbm [shape: f32[8,128], index: 3, kind: input, shape index: {}]
  %s4 = inlined_call_operand.hbm [shape: f32[8,128], index: 4, kind: output, shape index: {}]
  %s5 = sld [smem:[#allocation0]]
  $region42: #{tpu_custom_call.1} parent=0
    _
  %s7 = ssub.s32 1, %s5
  %s8 = scalar_select 0, %s7, %s5
  $region1: #{tpu_custom_call.1} parent=0
    #allocation2 [shape = 'u8[4096]{0}', space=vmem, size = 0x1000, scoped, tag = 'input window, operand 0, single buffered']
    #allocation3 [shape = 's32[1]{0}', space=sflag, size = 0x4, scoped, tag = 'scoped memory for tpu_custom_call.1']
    #allocation4 [shape = 's32[1]{0}', space=sflag, size = 0x4, scoped, tag = 'scoped memory for tpu_custom_call.1']
    #allocation5 [shape = 'u8[32768]{0}', space=vmem, size = 0x8000, scoped, tag = 'input window, operand 1, single buffered']
    #allocation6 [shape = 's32[1]{0}', space=sflag, size = 0x4, scoped, tag = 'scoped memory for tpu_custom_call.1']
    #allocation7 [shape = 'u8[32768]{0}', space=vmem, size = 0x8000, scoped, tag = 'input window, operand 2, single buffered']
    #allocation8 [shape = 'u8[4096]{0}', space=vmem, size = 0x1000, scoped, tag = 'input window, operand 3, single buffered']
    #allocation9 [shape = 's32[1]{0}', space=sflag, size = 0x4, scoped, tag = 'scoped memory for tpu_custom_call.1']
    #allocation10 [shape = 'u8[4096]{0}', space=vmem, size = 0x1000, scoped, tag = 'output window, operand 0, single buffered']
    %9 = vsyncpa [#allocation3], 0
    %10 = vsyncpa [#allocation6], 0
    %11 = vsyncpa [#allocation9], 0
    %12 = vsyncpa [#allocation4], 0
    // Predicated region
    $region2: #{tpu_custom_call.1} parent=1 // pred_check
      _
    $region3: #{tpu_custom_call.1} parent=1 // pred_check_branch
      %14 = sbr.rel (0) target = $region5
    $region4: #{tpu_custom_call.1} parent=1 // pred_region
      %s16 = ssub.s32 128, 128
      %17 = vsyncadd [#allocation3], %s16
      %s19 = sshll.u32 [#allocation2], 4
      %s20 = int_to_ptr.vmem [resolvable:$true] %s19
      %22 = dma.hbm_to_vmem [thread:$0]  %s0, 128, %s20, [#allocation3]
    $region5: #{tpu_custom_call.1} parent=1 // pred_fallthru
      _
    // Predicated region
    $region6: #{tpu_custom_call.1} parent=1 // pred_check
      _
    $region7: #{tpu_custom_call.1} parent=1 // pred_check_branch
      %24 = sbr.rel (0) target = $region9
    $region8: #{tpu_custom_call.1} parent=1 // pred_region
      %s26 = ssub.s32 1024, 1024
      %27 = vsyncadd [#allocation6], %s26
      %s28 = sshll.u32 [#allocation5], 4
      %s29 = int_to_ptr.vmem [resolvable:$true] %s28
      %34 = dma.hbm_to_vmem [thread:$0]  %s1, 1024, %s29, [#allocation6], 64, 64, 4
    $region9: #{tpu_custom_call.1} parent=1 // pred_fallthru
      _
    // Predicated region
    $region10: #{tpu_custom_call.1} parent=1 // pred_check
      _
    $region11: #{tpu_custom_call.1} parent=1 // pred_check_branch
      %36 = sbr.rel (0) target = $region13
    $region12: #{tpu_custom_call.1} parent=1 // pred_region
      %s38 = ssub.s32 1024, 1024
      %39 = vsyncadd [#allocation6], %s38
      %s40 = sshll.u32 [#allocation7], 4
      %s41 = int_to_ptr.vmem [resolvable:$true] %s40
      %46 = dma.hbm_to_vmem [thread:$0]  %s2, 1024, %s41, [#allocation6], 64, 64, 4
    $region13: #{tpu_custom_call.1} parent=1 // pred_fallthru
      _
    // Predicated region
    $region14: #{tpu_custom_call.1} parent=1 // pred_check
      _
    $region15: #{tpu_custom_call.1} parent=1 // pred_check_branch
      %48 = sbr.rel (0) target = $region17
    $region16: #{tpu_custom_call.1} parent=1 // pred_region
      %s50 = ssub.s32 128, 128
      %51 = vsyncadd [#allocation9], %s50
      %s53 = sshll.u32 [#allocation8], 4
      %s54 = int_to_ptr.vmem [resolvable:$true] %s53
      %56 = dma.hbm_to_vmem [thread:$0]  %s3, 128, %s54, [#allocation9]
    $region17: #{tpu_custom_call.1} parent=1 // pred_fallthru
      _
    // Predicated region
    $region18: #{tpu_custom_call.1} parent=1 // pred_check
      _
    $region19: #{tpu_custom_call.1} parent=1 // pred_check_branch
      %58 = sbr.rel (0) target = $region21
    $region20: #{tpu_custom_call.1} parent=1 // pred_region
      %59 = dma.done [#allocation3], 128
    $region21: #{tpu_custom_call.1} parent=1 // pred_fallthru
      _
    // Predicated region
    $region22: #{tpu_custom_call.1} parent=1 // pred_check
      _
    $region23: #{tpu_custom_call.1} parent=1 // pred_check_branch
      %61 = sbr.rel (0) target = $region25
    $region24: #{tpu_custom_call.1} parent=1 // pred_region
      %62 = dma.done [#allocation6], 1024
    $region25: #{tpu_custom_call.1} parent=1 // pred_fallthru
      _
    // Predicated region
    $region26: #{tpu_custom_call.1} parent=1 // pred_check
      _
    $region27: #{tpu_custom_call.1} parent=1 // pred_check_branch
      %64 = sbr.rel (0) target = $region29
    $region28: #{tpu_custom_call.1} parent=1 // pred_region
      %65 = dma.done [#allocation6], 1024
    $region29: #{tpu_custom_call.1} parent=1 // pred_fallthru
      _
    // Predicated region
    $region30: #{tpu_custom_call.1} parent=1 // pred_check
      _
    $region31: #{tpu_custom_call.1} parent=1 // pred_check_branch
      %67 = sbr.rel (0) target = $region33
    $region32: #{tpu_custom_call.1} parent=1 // pred_region
      %68 = dma.done [#allocation9], 128
    $region33: #{tpu_custom_call.1} parent=1 // pred_fallthru
      _
    %v70 = vld [vmem:[#allocation2] sm:$0xff]
    %v71 = vld [vmem:[#allocation8] sm:$0x1]
    %v72 = vld [vmem:[#allocation8 + $0x1] sm:$0x1]
    %v73 = vld [vmem:[#allocation8 + $0x2] sm:$0x1]
    %v74 = vld [vmem:[#allocation8 + $0x3] sm:$0x1]
    %v75 = vld [vmem:[#allocation8 + $0x4] sm:$0x1]
    %v76 = vld [vmem:[#allocation8 + $0x5] sm:$0x1]
    %v77 = vpack.c.bf16 %v70, %v70
    %v78 = vld [vmem:[#allocation5] sm:$0xf]
    %v79 = vld [vmem:[#allocation5 + $0x4] sm:$0xf]
    %v80 = vld [vmem:[#allocation5 + $0x8] sm:$0xf]
    %v81 = vld [vmem:[#allocation5 + $0xc] sm:$0xf]
    %v82 = vld [vmem:[#allocation5 + $0x10] sm:$0xf]
    %v83 = vld [vmem:[#allocation5 + $0x14] sm:$0xf]
    %v84 = vld [vmem:[#allocation5 + $0x18] sm:$0xf]
    %v85 = vld [vmem:[#allocation5 + $0x1c] sm:$0xf]
    %v86 = vld [vmem:[#allocation5 + $0x20] sm:$0xf]
    %v87 = vld [vmem:[#allocation5 + $0x24] sm:$0xf]
    %v88 = vld [vmem:[#allocation5 + $0x28] sm:$0xf]
    %v89 = vld [vmem:[#allocation5 + $0x2c] sm:$0xf]
    %v90 = vld [vmem:[#allocation5 + $0x30] sm:$0xf]
    %v91 = vld [vmem:[#allocation5 + $0x34] sm:$0xf]
    %v92 = vld [vmem:[#allocation5 + $0x38] sm:$0xf]
    %v93 = vld [vmem:[#allocation5 + $0x3c] sm:$0xf]
    %v94 = vlaneseq
    %v95 = vshrl.u32 %v94, 7
    %v96 = vsub.s32 0, %v95
    %v97 = vrot.slane %v71, %v96
    %v114 = vunpack.c.l.b16 %v78
    %v115 = vunpack.c.l.b16 %v79
    %v116 = vunpack.c.l.b16 %v80
    %v117 = vunpack.c.l.b16 %v81
    %v118 = vunpack.c.l.b16 %v82
    %v119 = vunpack.c.l.b16 %v83
    %v120 = vunpack.c.l.b16 %v84
    %v121 = vunpack.c.l.b16 %v85
    %v122 = vunpack.c.l.b16 %v86
    %v123 = vunpack.c.l.b16 %v87
    %v124 = vunpack.c.l.b16 %v88
    %v125 = vunpack.c.l.b16 %v89
    %v126 = vunpack.c.l.b16 %v90
    %v127 = vunpack.c.l.b16 %v91
    %v128 = vunpack.c.l.b16 %v92
    %v129 = vunpack.c.l.b16 %v93
    %v130 = vpack.c.b16 %v115, %v114
    %v131 = vpack.c.b16 %v117, %v116
    %v132 = vpack.c.b16 %v119, %v118
    %v133 = vpack.c.b16 %v121, %v120
    %v134 = vpack.c.b16 %v123, %v122
    %v135 = vpack.c.b16 %v125, %v124
    %v136 = vpack.c.b16 %v127, %v126
    %v137 = vpack.c.b16 %v129, %v128
    %146 = vmatprep.subr.bf16.mxu0 0
    %147 = vmatpush1.bf16.msra.mxu0 %v137
    %148 = vmatprep.subr.bf16.mxu0 0
    %149 = vmatpush1.bf16.msra.mxu0 %v136
    %150 = vmatprep.subr.bf16.mxu0 0
    %151 = vmatpush1.bf16.msra.mxu0 %v135
    %152 = vmatprep.subr.bf16.mxu0 0
    %153 = vmatpush1.bf16.msra.mxu0 %v134
    %154 = vmatprep.subr.bf16.mxu0 0
    %155 = vmatpush1.bf16.msra.mxu0 %v133
    %156 = vmatprep.subr.bf16.mxu0 0
    %157 = vmatpush1.bf16.msra.mxu0 %v132
    %158 = vmatprep.subr.bf16.mxu0 0
    %159 = vmatpush1.bf16.msra.mxu0 %v131
    %160 = vmatprep.subr.bf16.mxu0 0
    %161 = vmatpush1.bf16.msra.mxu0 %v130
    %162 = vmatprep.subr.bf16.mxu0 0
    %163 = vmatpush2.bf16.msra.mxu0 0
    %164 = vmatprep.subr.bf16.mxu0 0
    %165 = vmatpush2.bf16.msra.mxu0 0
    %166 = vmatprep.subr.bf16.mxu0 0
    %167 = vmatpush2.bf16.msra.mxu0 0
    %168 = vmatprep.subr.bf16.mxu0 0
    %169 = vmatpush2.bf16.msra.mxu0 0
    %170 = vmatprep.subr.bf16.mxu0 0
    %171 = vmatpush2.bf16.msra.mxu0 0
    %172 = vmatprep.subr.bf16.mxu0 0
    %173 = vmatpush2.bf16.msra.mxu0 0
    %174 = vmatprep.subr.bf16.mxu0 0
    %175 = vmatpush2.bf16.msra.mxu0 0
    %176 = vmatprep.subr.bf16.mxu0 0
    %177 = vmatpush2.bf16.msra.mxu0 0
    %178 = vmatprep.mubr.bf16.mxu0 0
    %179 = vmatmul.mubr.bf16.gmra.mxu0 %v77
    %v180 = vpop.f32.mrf.mxu0
    %v181 = vadd.f32 %v97, %v180
    %v182 = vpop.f32.mrf.mxu0
    %v183 = vpop.f32.mrf.mxu0
    %v184 = vpop.f32.mrf.mxu0
    %185 = vdwg.mxu0
    %v186 = vmul.f32 %v181, 0.2
    %v187 = vmax.f32 %v181, %v186
    %188 = vadd.xlane.f32.xlu0 %v187
    %v189 = vpop.xlane.xlu0 %188
    %v190 = vmul.f32 %v189, 0.03125
    %v191 = vsub.f32 %v187, %v190
    %v192 = vmul.f32 %v191, %v191
    %193 = vadd.xlane.f32.xlu0 %v192
    %v194 = vpop.xlane.xlu0 %193
    %v195 = vmul.f32 %v190, %v190
    %v196 = vmul.f32 %v195, 96.0
    %v197 = vsub.f32 %v194, %v196
    %v198 = vmul.f32 %v197, 0.03125
    %v199 = vmax.f32 %v198, 0.0
    %v200 = vadd.f32 %v199, 1e-05
    %v201 = vrsqrt.pop %v200
    %v202 = vmul.f32 %v191, %v201
    %v203 = vlaneseq
    %v204 = vshrl.u32 %v203, 7
    %v205 = vsub.s32 0, %v204
    %v206 = vrot.slane %v72, %v205
    %v207 = vmul.f32 %v202, %v206
    %v208 = vlaneseq
    %v209 = vshrl.u32 %v208, 7
    %v210 = vsub.s32 0, %v209
    %v211 = vrot.slane %v73, %v210
    %v212 = vadd.f32 %v207, %v211
    %v213 = vpack.c.bf16 %v212, %v212
    %v214 = vld [vmem:[#allocation7] sm:$0xf]
    %v215 = vld [vmem:[#allocation7 + $0x4] sm:$0xf]
    %v216 = vld [vmem:[#allocation7 + $0x8] sm:$0xf]
    %v217 = vld [vmem:[#allocation7 + $0xc] sm:$0xf]
    %v218 = vld [vmem:[#allocation7 + $0x10] sm:$0xf]
    %v219 = vld [vmem:[#allocation7 + $0x14] sm:$0xf]
    %v220 = vld [vmem:[#allocation7 + $0x18] sm:$0xf]
    %v221 = vld [vmem:[#allocation7 + $0x1c] sm:$0xf]
    %v222 = vld [vmem:[#allocation7 + $0x20] sm:$0xf]
    %v223 = vld [vmem:[#allocation7 + $0x24] sm:$0xf]
    %v224 = vld [vmem:[#allocation7 + $0x28] sm:$0xf]
    %v225 = vld [vmem:[#allocation7 + $0x2c] sm:$0xf]
    %v226 = vld [vmem:[#allocation7 + $0x30] sm:$0xf]
    %v227 = vld [vmem:[#allocation7 + $0x34] sm:$0xf]
    %v228 = vld [vmem:[#allocation7 + $0x38] sm:$0xf]
    %v229 = vld [vmem:[#allocation7 + $0x3c] sm:$0xf]
    %v230 = vlaneseq
    %v231 = vshrl.u32 %v230, 7
    %v232 = vsub.s32 0, %v231
    %v233 = vrot.slane %v74, %v232
    %v250 = vunpack.c.l.b16 %v214
    %v251 = vunpack.c.l.b16 %v215
    %v252 = vunpack.c.l.b16 %v216
    %v253 = vunpack.c.l.b16 %v217
    %v254 = vunpack.c.l.b16 %v218
    %v255 = vunpack.c.l.b16 %v219
    %v256 = vunpack.c.l.b16 %v220
    %v257 = vunpack.c.l.b16 %v221
    %v258 = vunpack.c.l.b16 %v222
    %v259 = vunpack.c.l.b16 %v223
    %v260 = vunpack.c.l.b16 %v224
    %v261 = vunpack.c.l.b16 %v225
    %v262 = vunpack.c.l.b16 %v226
    %v263 = vunpack.c.l.b16 %v227
    %v264 = vunpack.c.l.b16 %v228
    %v265 = vunpack.c.l.b16 %v229
    %v266 = vpack.c.b16 %v251, %v250
    %v267 = vpack.c.b16 %v253, %v252
    %v268 = vpack.c.b16 %v255, %v254
    %v269 = vpack.c.b16 %v257, %v256
    %v270 = vpack.c.b16 %v259, %v258
    %v271 = vpack.c.b16 %v261, %v260
    %v272 = vpack.c.b16 %v263, %v262
    %v273 = vpack.c.b16 %v265, %v264
    %282 = vmatprep.subr.bf16.mxu0 0
    %283 = vmatpush1.bf16.msra.mxu0 %v273
    %284 = vmatprep.subr.bf16.mxu0 0
    %285 = vmatpush1.bf16.msra.mxu0 %v272
    %286 = vmatprep.subr.bf16.mxu0 0
    %287 = vmatpush1.bf16.msra.mxu0 %v271
    %288 = vmatprep.subr.bf16.mxu0 0
    %289 = vmatpush1.bf16.msra.mxu0 %v270
    %290 = vmatprep.subr.bf16.mxu0 0
    %291 = vmatpush1.bf16.msra.mxu0 %v269
    %292 = vmatprep.subr.bf16.mxu0 0
    %293 = vmatpush1.bf16.msra.mxu0 %v268
    %294 = vmatprep.subr.bf16.mxu0 0
    %295 = vmatpush1.bf16.msra.mxu0 %v267
    %296 = vmatprep.subr.bf16.mxu0 0
    %297 = vmatpush1.bf16.msra.mxu0 %v266
    %298 = vmatprep.subr.bf16.mxu0 0
    %299 = vmatpush2.bf16.msra.mxu0 0
    %300 = vmatprep.subr.bf16.mxu0 0
    %301 = vmatpush2.bf16.msra.mxu0 0
    %302 = vmatprep.subr.bf16.mxu0 0
    %303 = vmatpush2.bf16.msra.mxu0 0
    %304 = vmatprep.subr.bf16.mxu0 0
    %305 = vmatpush2.bf16.msra.mxu0 0
    %306 = vmatprep.subr.bf16.mxu0 0
    %307 = vmatpush2.bf16.msra.mxu0 0
    %308 = vmatprep.subr.bf16.mxu0 0
    %309 = vmatpush2.bf16.msra.mxu0 0
    %310 = vmatprep.subr.bf16.mxu0 0
    %311 = vmatpush2.bf16.msra.mxu0 0
    %312 = vmatprep.subr.bf16.mxu0 0
    %313 = vmatpush2.bf16.msra.mxu0 0
    %314 = vmatprep.mubr.bf16.mxu0 0
    %315 = vmatmul.mubr.bf16.gmra.mxu0 %v213
    %v316 = vpop.f32.mrf.mxu0
    %v317 = vadd.f32 %v233, %v316
    %v318 = vpop.f32.mrf.mxu0
    %v319 = vpop.f32.mrf.mxu0
    %v320 = vpop.f32.mrf.mxu0
    %321 = vdwg.mxu0
    %v322 = vmul.f32 %v317, 0.2
    %v323 = vmax.f32 %v317, %v322
    %324 = vadd.xlane.f32.xlu0 %v323
    %v325 = vpop.xlane.xlu0 %324
    %v326 = vmul.f32 %v325, 0.03125
    %v327 = vsub.f32 %v323, %v326
    %v328 = vmul.f32 %v327, %v327
    %329 = vadd.xlane.f32.xlu0 %v328
    %v330 = vpop.xlane.xlu0 %329
    %v331 = vmul.f32 %v326, %v326
    %v332 = vmul.f32 %v331, 96.0
    %v333 = vsub.f32 %v330, %v332
    %v334 = vmul.f32 %v333, 0.03125
    %v335 = vmax.f32 %v334, 0.0
    %v336 = vadd.f32 %v335, 1e-05
    %v337 = vrsqrt.pop %v336
    %v338 = vmul.f32 %v327, %v337
    %v339 = vlaneseq
    %v340 = vshrl.u32 %v339, 7
    %v341 = vsub.s32 0, %v340
    %v342 = vrot.slane %v75, %v341
    %v343 = vmul.f32 %v338, %v342
    %v344 = vlaneseq
    %v345 = vshrl.u32 %v344, 7
    %v346 = vsub.s32 0, %v345
    %v347 = vrot.slane %v76, %v346
    %v348 = vadd.f32 %v343, %v347
    %v349 = vadd.f32 %v70, %v348
    %350 = vst [vmem:[#allocation10] sm:$0xff] %v349
    // Predicated region
    $region34: #{tpu_custom_call.1} parent=1 // pred_check
      _
    $region35: #{tpu_custom_call.1} parent=1 // pred_check_branch
      %352 = sbr.rel (0) target = $region37
    $region36: #{tpu_custom_call.1} parent=1 // pred_region
      %s354 = ssub.s32 128, 128
      %355 = vsyncadd [#allocation4], %s354
      %s357 = sshll.u32 [#allocation10], 4
      %s358 = int_to_ptr.vmem [resolvable:$true] %s357
      %360 = dma.vmem_to_hbm [thread:$0]  %s358, 128, %s4, [#allocation4]
    $region37: #{tpu_custom_call.1} parent=1 // pred_fallthru
      _
    // Predicated region
    $region38: #{tpu_custom_call.1} parent=1 // pred_check
      _
    $region39: #{tpu_custom_call.1} parent=1 // pred_check_branch
      %362 = sbr.rel (0) target = $region41
    $region40: #{tpu_custom_call.1} parent=1 // pred_region
      %363 = dma.done [#allocation4], 128
    $region41: #{tpu_custom_call.1} parent=1 // pred_fallthru
      _
    %364 = vsyncpa [#allocation3], 1
    %365 = vsyncpa [#allocation6], 1
    %366 = vsyncpa [#allocation9], 1
    %367 = vsyncpa [#allocation4], 1

</llo_original>
